<compile_context>
chip_gen: v6e
topology: v6e:2x2x1
jax: 0.10.0
libtpu: 0.0.40
codegen_flags: <defaults>
</compile_context>

<pallas_src>
import math

import jax
import jax.numpy as jnp
from jax.experimental import pallas as pl
from jax.experimental.pallas import tpu as pltpu


def _linear_block_kernel(x_ref, w_ref, b_ref, o_ref):
    # x_ref: (tm, in_dim)  w_ref: (in_dim, out_dim)  b_ref: (1, out_dim)
    # o_ref: (tm, out_dim)
    x = jnp.maximum(x_ref[...], jnp.zeros((), x_ref.dtype))      # ReLU first
    acc = jnp.dot(x, w_ref[...], preferred_element_type=jnp.float32)
    acc = acc + b_ref[...].astype(jnp.float32)
    o_ref[...] = acc.astype(o_ref.dtype)


def _pick_row_tile(M, max_rows):
    """Pick a row tile.  Prefer a tile that divides M exactly (no HBM pad)."""
    if M <= max_rows:
        return M, M                      # one block covering all rows
    # Largest multiple-of-8 divisor of M not exceeding max_rows.
    start = max_rows - (max_rows % 8)
    for cand in range(start, 0, -8):
        if M % cand == 0:
            return cand, M
    # Rare fallback (ragged / prime M): pad up to a tile multiple.
    tm = max_rows
    return tm, pl.cdiv(M, tm) * tm


def linear_block_pallas(x, weight, bias, *, block_rows=512):
    """Forward of LinearBlock: linear(relu(x)).

    x:      (..., in_dim)
    weight: (out_dim, in_dim)   (PyTorch nn.Linear layout)
    bias:   (out_dim,)
    returns (..., out_dim)
    """
    in_dim = x.shape[-1]
    out_dim = weight.shape[0]
    lead = x.shape[:-1]
    M = int(math.prod(lead)) if lead else 1

    x2 = x.reshape(M, in_dim)            # no transpose: feature axis is last
    w_mat = weight.T                     # (in_dim, out_dim)
    b_mat = bias.reshape(1, out_dim)

    tm, M_pad = _pick_row_tile(M, block_rows)
    if M_pad != M:                       # rare fallback only
        x2 = jnp.pad(x2, ((0, M_pad - M), (0, 0)))

    out_flat = pl.pallas_call(
        _linear_block_kernel,
        out_shape=jax.ShapeDtypeStruct((M_pad, out_dim), x.dtype),
        grid_spec=pltpu.PrefetchScalarGridSpec(
            num_scalar_prefetch=0,
            grid=(M_pad // tm,),
            in_specs=[
                pl.BlockSpec((tm, in_dim), lambda i: (i, 0)),      # x rows
                pl.BlockSpec((in_dim, out_dim), lambda i: (0, 0)),  # full W^T
                pl.BlockSpec((1, out_dim), lambda i: (0, 0)),       # bias
            ],
            out_specs=pl.BlockSpec((tm, out_dim), lambda i: (i, 0)),
        ),
        compiler_params=pltpu.CompilerParams(
            dimension_semantics=("parallel",)),
    )(x2, w_mat, b_mat)

    if M_pad != M:
        out_flat = out_flat[:M]
    return out_flat.reshape(*lead, out_dim)


if __name__ == "__main__":
    key = jax.random.PRNGKey(0)
    k_x, k_w, k_b = jax.random.split(key, 3)

    # Small shapes consistent with the module: batch=2, seq=8, hidden=32.
    B, S, IN_DIM, OUT_DIM = 2, 8, 32, 32

    x = jax.random.normal(k_x, (B, S, IN_DIM), dtype=jnp.float32)

    # PyTorch nn.Linear-style init: uniform(-1/sqrt(fan_in), 1/sqrt(fan_in)).
    bound = 1.0 / (IN_DIM ** 0.5)
    weight = jax.random.uniform(k_w, (OUT_DIM, IN_DIM),
                                minval=-bound, maxval=bound, dtype=jnp.float32)
    bias = jax.random.uniform(k_b, (OUT_DIM,),
                              minval=-bound, maxval=bound, dtype=jnp.float32)

    out = linear_block_pallas(x, weight, bias)
    out = jax.block_until_ready(out)

    # Plain-JAX reference: linear(relu(x)).
    ref = jnp.maximum(x, 0.0) @ weight.T + bias

    assert out.shape == (B, S, OUT_DIM)
    assert jnp.allclose(out, ref, atol=1e-5, rtol=1e-5)

    print("KERNEL_OK")
</pallas_src>

<mosaic_0001>
module attributes {stable_mosaic.version = 11 : i64} {
  func.func @_linear_block_kernel(%arg0: i32, %arg1: memref<16x32xf32, #tpu.memory_space<vmem>>, %arg2: memref<32x32xf32, #tpu.memory_space<vmem>>, %arg3: memref<1x32xf32, #tpu.memory_space<vmem>>, %arg4: memref<16x32xf32, #tpu.memory_space<vmem>>) attributes {dimension_semantics = [#tpu.dimension_semantics<parallel>], iteration_bounds = array<i64: 1>, scalar_prefetch = 0 : i64, scratch_operands = 0 : i64, tpu.core_type = #tpu.core_type<tc>, window_params = [{transform_indices = @transform_0, window_bounds = array<i64: 16, 32>}, {pipeline_mode = #tpu.pipeline_mode<synchronous>, transform_indices = @transform_1, window_bounds = array<i64: 32, 32>}, {pipeline_mode = #tpu.pipeline_mode<synchronous>, transform_indices = @transform_2, window_bounds = array<i64: 1, 32>}, {transform_indices = @transform_3, window_bounds = array<i64: 16, 32>}]} {
    %c0 = arith.constant 0 : index
    %c0_0 = arith.constant 0 : index
    %0 = vector.load %arg1[%c0, %c0_0] : memref<16x32xf32, #tpu.memory_space<vmem>>, vector<16x32xf32>
    %cst = arith.constant 0.000000e+00 : f32
    %1 = vector.broadcast %cst : f32 to vector<16x32xf32>
    %2 = arith.maximumf %0, %1 : vector<16x32xf32>
    %c0_1 = arith.constant 0 : index
    %c0_2 = arith.constant 0 : index
    %3 = vector.load %arg2[%c0_1, %c0_2] : memref<32x32xf32, #tpu.memory_space<vmem>>, vector<32x32xf32>
    %cst_3 = arith.constant dense<0.000000e+00> : vector<16x32xf32>
    %4 = tpu.matmul %2, %3, %cst_3 {dimension_numbers = #tpu.dot_dimension_numbers<[1], [0], [0], [1], [0, 0, 1, 1], [], []>} : vector<16x32xf32>, vector<32x32xf32>, vector<16x32xf32> -> vector<16x32xf32>
    %c0_4 = arith.constant 0 : index
    %c0_5 = arith.constant 0 : index
    %5 = vector.load %arg3[%c0_4, %c0_5] : memref<1x32xf32, #tpu.memory_space<vmem>>, vector<1x32xf32>
    %6 = vector.broadcast %5 : vector<1x32xf32> to vector<16x32xf32>
    %7 = arith.addf %4, %6 : vector<16x32xf32>
    %c0_6 = arith.constant 0 : index
    %c0_7 = arith.constant 0 : index
    %8 = vector.load %arg4[%c0_6, %c0_7] : memref<16x32xf32, #tpu.memory_space<vmem>>, vector<16x32xf32>
    tpu.vector_store %arg4[%c0_6, %c0_7], %7 {strides = array<i32>} : memref<16x32xf32, #tpu.memory_space<vmem>>, vector<16x32xf32>,
    return
  }
  func.func @transform_0(%arg0: i32) -> (i32, i32) {
    %c0_i32 = arith.constant 0 : i32
    %c0_i32_0 = arith.constant 0 : i32
    return %arg0, %c0_i32 : i32, i32
  }
  func.func @transform_1(%arg0: i32) -> (i32, i32) {
    %c0_i32 = arith.constant 0 : i32
    %c0_i32_0 = arith.constant 0 : i32
    %c0_i32_1 = arith.constant 0 : i32
    return %c0_i32, %c0_i32_0 : i32, i32
  }
  func.func @transform_2(%arg0: i32) -> (i32, i32) {
    %c0_i32 = arith.constant 0 : i32
    %c0_i32_0 = arith.constant 0 : i32
    %c0_i32_1 = arith.constant 0 : i32
    return %c0_i32, %c0_i32_0 : i32, i32
  }
  func.func @transform_3(%arg0: i32) -> (i32, i32) {
    %c0_i32 = arith.constant 0 : i32
    %c0_i32_0 = arith.constant 0 : i32
    return %arg0, %c0_i32 : i32, i32
  }
}

</mosaic_0001>

<llo_original>
// kernel: tpu_custom_call.1
$region0: #{tpu_custom_call.1}
  #allocation0 [shape = 'u32[]', space=smem, size = 0x4, offset = 0x4, fixed_abs, tag = 'smem constant byte address 0x4 - core index']
  #allocation1 [shape = 'u32[144,128]{1,0:T(1,128)}', space=vmem, size = 0x12000, scoped, tag = 'internal scratch']
  %s0 = inlined_call_operand.hbm [shape: f32[16,32], index: 0, kind: input, shape index: {}]
  %s1 = inlined_call_operand.hbm [shape: f32[32,32], index: 1, kind: input, shape index: {}]
  %s2 = inlined_call_operand.vmem [shape: f32[1,32], index: 2, kind: input, shape index: {}]
  %s3 = inlined_call_operand.hbm [shape: f32[16,32], index: 3, kind: output, shape index: {}]
  %s4 = sld [smem:[#allocation0]]
  $region30: #{tpu_custom_call.1} parent=0
    _
  %s6 = ssub.s32 1, %s4
  %s7 = scalar_select 0, %s6, %s4
  $region1: #{tpu_custom_call.1} parent=0
    #allocation2 [shape = 'u8[8192]{0}', space=vmem, size = 0x2000, scoped, tag = 'input window, operand 0, single buffered']
    #allocation3 [shape = 's32[1]{0}', space=sflag, size = 0x4, scoped, tag = 'scoped memory for tpu_custom_call.1']
    #allocation4 [shape = 's32[1]{0}', space=sflag, size = 0x4, scoped, tag = 'scoped memory for tpu_custom_call.1']
    #allocation5 [shape = 'u8[16384]{0}', space=vmem, size = 0x4000, scoped, tag = 'input window, operand 1, single buffered']
    #allocation6 [shape = 's32[1]{0}', space=sflag, size = 0x4, scoped, tag = 'scoped memory for tpu_custom_call.1']
    #allocation7 [shape = 'u8[8192]{0}', space=vmem, size = 0x2000, scoped, tag = 'output window, operand 0, single buffered']
    %8 = vsyncpa [#allocation3], 0
    %9 = vsyncpa [#allocation6], 0
    %10 = vsyncpa [#allocation4], 0
    // Predicated region
    $region2: #{tpu_custom_call.1} parent=1 // pred_check
      _
    $region3: #{tpu_custom_call.1} parent=1 // pred_check_branch
      %12 = sbr.rel (0) target = $region5
    $region4: #{tpu_custom_call.1} parent=1 // pred_region
      %s14 = ssub.s32 256, 256
      %15 = vsyncadd [#allocation3], %s14
      %s16 = sshll.u32 [#allocation2], 4
      %s17 = int_to_ptr.vmem [resolvable:$true] %s16
      %22 = dma.hbm_to_vmem [thread:$0]  %s0, 256, %s17, [#allocation3], 128, 128, 8
    $region5: #{tpu_custom_call.1} parent=1 // pred_fallthru
      _
    // Predicated region
    $region6: #{tpu_custom_call.1} parent=1 // pred_check
      _
    $region7: #{tpu_custom_call.1} parent=1 // pred_check_branch
      %24 = sbr.rel (0) target = $region9
    $region8: #{tpu_custom_call.1} parent=1 // pred_region
      %s26 = ssub.s32 512, 512
      %27 = vsyncadd [#allocation6], %s26
      %s28 = sshll.u32 [#allocation5], 4
      %s29 = int_to_ptr.vmem [resolvable:$true] %s28
      %34 = dma.hbm_to_vmem [thread:$0]  %s1, 512, %s29, [#allocation6], 128, 128, 8
    $region9: #{tpu_custom_call.1} parent=1 // pred_fallthru
      _
    // Predicated region
    $region10: #{tpu_custom_call.1} parent=1 // pred_check
      _
    $region11: #{tpu_custom_call.1} parent=1 // pred_check_branch
      %36 = sbr.rel (0) target = $region13
    $region12: #{tpu_custom_call.1} parent=1 // pred_region
      _
    $region13: #{tpu_custom_call.1} parent=1 // pred_fallthru
      _
    // Predicated region
    $region14: #{tpu_custom_call.1} parent=1 // pred_check
      _
    $region15: #{tpu_custom_call.1} parent=1 // pred_check_branch
      %38 = sbr.rel (0) target = $region17
    $region16: #{tpu_custom_call.1} parent=1 // pred_region
      %39 = dma.done [#allocation3], 256
    $region17: #{tpu_custom_call.1} parent=1 // pred_fallthru
      _
    // Predicated region
    $region18: #{tpu_custom_call.1} parent=1 // pred_check
      _
    $region19: #{tpu_custom_call.1} parent=1 // pred_check_branch
      %41 = sbr.rel (0) target = $region21
    $region20: #{tpu_custom_call.1} parent=1 // pred_region
      %42 = dma.done [#allocation6], 512
    $region21: #{tpu_custom_call.1} parent=1 // pred_fallthru
      _
    %v43 = vld [vmem:[#allocation2] sm:$0xff]
    %v44 = vld [vmem:[#allocation2 + $0x8] sm:$0xff]
    %v45 = vmax.f32 %v43, 0.0
    %v46 = vmax.f32 %v44, 0.0
    %v47 = vld [vmem:[#allocation5] sm:$0xff]
    %v48 = vld [vmem:[#allocation5 + $0x8] sm:$0xff]
    %v49 = vld [vmem:[#allocation5 + $0x10] sm:$0xff]
    %v50 = vld [vmem:[#allocation5 + $0x18] sm:$0xff]
    %v51 = vld [vmem:[%s2] sm:$0x1]
    %v53 = vlaneseq
    %v54 = vshrl.u32 %v53, 7
    %v55 = vsub.s32 0, %v54
    %v56 = vrot.slane %v51, %v55
    %vm58 = vcmask 261120
    %v60 = vsel %vm58, %v45, 0
    %v63 = vsel %vm58, %v46, 0
    %65 = vmatprep.subr.mxu0 0.0
    %66 = vmatpush1.msra.mxu0 0.0
    %67 = vmatprep.subr.mxu0 0.0
    %68 = vmatpush1.msra.mxu0 0.0
    %69 = vmatprep.subr.mxu0 0.0
    %70 = vmatpush1.msra.mxu0 0.0
    %71 = vmatprep.subr.mxu0 0.0
    %72 = vmatpush1.msra.mxu0 0.0
    %73 = vmatprep.subr.mxu0 0.0
    %74 = vmatpush1.msra.mxu0 0.0
    %75 = vmatprep.subr.mxu0 0.0
    %76 = vmatpush1.msra.mxu0 0.0
    %77 = vmatprep.subr.mxu0 0.0
    %78 = vmatpush1.msra.mxu0 0.0
    %79 = vmatprep.subr.mxu0 0.0
    %80 = vmatpush1.msra.mxu0 0.0
    %81 = vmatprep.subr.mxu0 0.0
    %82 = vmatpush1.msra.mxu0 0.0
    %83 = vmatprep.subr.mxu0 0.0
    %84 = vmatpush1.msra.mxu0 0.0
    %85 = vmatprep.subr.mxu0 0.0
    %86 = vmatpush1.msra.mxu0 0.0
    %87 = vmatprep.subr.mxu0 0.0
    %88 = vmatpush1.msra.mxu0 0.0
    %89 = vmatprep.subr.mxu0 0.0
    %90 = vmatpush1.msra.mxu0 %v50
    %91 = vmatprep.subr.mxu0 0.0
    %92 = vmatpush1.msra.mxu0 %v49
    %93 = vmatprep.subr.mxu0 0.0
    %94 = vmatpush1.msra.mxu0 %v48
    %95 = vmatprep.subr.mxu0 0.0
    %96 = vmatpush1.msra.mxu0 %v47
    %97 = vmatprep.subr.mxu0 0.0
    %98 = vmatpush2.msra.mxu0 0.0
    %99 = vmatprep.subr.mxu0 0.0
    %100 = vmatpush2.msra.mxu0 0.0
    %101 = vmatprep.subr.mxu0 0.0
    %102 = vmatpush2.msra.mxu0 0.0
    %103 = vmatprep.subr.mxu0 0.0
    %104 = vmatpush2.msra.mxu0 0.0
    %105 = vmatprep.subr.mxu0 0.0
    %106 = vmatpush2.msra.mxu0 0.0
    %107 = vmatprep.subr.mxu0 0.0
    %108 = vmatpush2.msra.mxu0 0.0
    %109 = vmatprep.subr.mxu0 0.0
    %110 = vmatpush2.msra.mxu0 0.0
    %111 = vmatprep.subr.mxu0 0.0
    %112 = vmatpush2.msra.mxu0 0.0
    %113 = vmatprep.subr.mxu0 0.0
    %114 = vmatpush2.msra.mxu0 0.0
    %115 = vmatprep.subr.mxu0 0.0
    %116 = vmatpush2.msra.mxu0 0.0
    %117 = vmatprep.subr.mxu0 0.0
    %118 = vmatpush2.msra.mxu0 0.0
    %119 = vmatprep.subr.mxu0 0.0
    %120 = vmatpush2.msra.mxu0 0.0
    %121 = vmatprep.subr.mxu0 0.0
    %122 = vmatpush2.msra.mxu0 0.0
    %123 = vmatprep.subr.mxu0 0.0
    %124 = vmatpush2.msra.mxu0 0.0
    %125 = vmatprep.subr.mxu0 0.0
    %126 = vmatpush2.msra.mxu0 0.0
    %127 = vmatprep.subr.mxu0 0.0
    %128 = vmatpush2.msra.mxu0 0.0
    %129 = vmatprep.mubr.f32.mxu0 0.0
    %130 = vmatmul.mubr.f32.gmra.mxu0 %v60
    %v131 = vpop.f32.mrf.mxu0
    %v132 = vadd.f32 %v56, %v131
    %v133 = vpop.f32.mrf.mxu0
    %134 = vmatprep.mubr.f32.mxu0 0.0
    %135 = vmatmul.mubr.f32.gmra.mxu0 %v63
    %v136 = vpop.f32.mrf.mxu0
    %v137 = vadd.f32 %v56, %v136
    %v138 = vpop.f32.mrf.mxu0
    %139 = vdwg.mxu0
    %140 = vst.msk [vmem:[#allocation7] sm:$0xff] %vm58, %v132
    %141 = vst.msk [vmem:[#allocation7 + $0x8] sm:$0xff] %vm58, %v137
    // Predicated region
    $region22: #{tpu_custom_call.1} parent=1 // pred_check
      _
    $region23: #{tpu_custom_call.1} parent=1 // pred_check_branch
      %143 = sbr.rel (0) target = $region25
    $region24: #{tpu_custom_call.1} parent=1 // pred_region
      %s145 = ssub.s32 256, 256
      %146 = vsyncadd [#allocation4], %s145
      %s147 = sshll.u32 [#allocation7], 4
      %s148 = int_to_ptr.vmem [resolvable:$true] %s147
      %153 = dma.vmem_to_hbm [thread:$0]  %s148, 256, %s3, [#allocation4], 128, 128, 8
    $region25: #{tpu_custom_call.1} parent=1 // pred_fallthru
      _
    // Predicated region
    $region26: #{tpu_custom_call.1} parent=1 // pred_check
      _
    $region27: #{tpu_custom_call.1} parent=1 // pred_check_branch
      %155 = sbr.rel (0) target = $region29
    $region28: #{tpu_custom_call.1} parent=1 // pred_region
      %156 = dma.done [#allocation4], 256
    $region29: #{tpu_custom_call.1} parent=1 // pred_fallthru
      _
    %157 = vsyncpa [#allocation3], 1
    %158 = vsyncpa [#allocation6], 1
    %159 = vsyncpa [#allocation4], 1

</llo_original>
